<compile_context>
chip_gen: v6e
topology: v6e:2x2x1
jax: 0.10.0
libtpu: 0.0.40
codegen_flags: <defaults>
</compile_context>

<pallas_src>
import math
import functools

import numpy as np
import jax
import jax.numpy as jnp
from jax import lax
from jax.experimental import pallas as pl
from jax.experimental.pallas import tpu as pltpu

# ---- globals mirrored from the PyTorch script -------------------------------
NHEAD = 1            # nhead
MULTI_STEP_NUM = 1   # multi_step_num
JUMP_STEP = 1        # jump_step
NX = 32              # Nx (spatial resolution); == d_model for this synthetic setup
NUM_LAYERS = 2       # TransformerEncoder(num_layers=...)


# ---- parameter / constant construction (plain JAX / numpy "glue") -----------
def generate_dspace(sz: int, a: int, b: int) -> np.ndarray:
    """Circulant banded matrices, identical to generate_Dspace (np.roll wraps)."""
    eye = np.eye(sz, dtype=np.float32)
    d = eye.copy()
    if a > 0:
        d += np.roll(eye, 1, axis=0)
    if a > 1:
        d += np.roll(eye, 2, axis=0)
    if a > 2:
        d += np.roll(eye, 3, axis=0)
    if b > 0:
        d += np.roll(eye, -1, axis=0)
    if b > 1:
        d += np.roll(eye, -2, axis=0)
    return np.asarray(d, np.float32)


def soft_max_mask(sz: int, num_step: int) -> np.ndarray:
    """Adams-Bashforth style lower-banded mask; identity for num_step == 1."""
    table = {
        1: [1.0],
        2: [3 / 2, -1 / 2],
        3: [23 / 12, -16 / 12, 5 / 12],
        4: [55 / 24, -59 / 24, 37 / 24, -9 / 24],
    }
    K = np.zeros((sz, sz), np.float32)
    for i, c in enumerate(table[num_step]):
        K += c * np.diag(np.ones(sz - i, np.float32), -i)
    for iii in range(num_step - 1):
        c2 = table[iii + 1]
        for jjj in range(iii + 1):
            K[iii, jjj] = c2[iii - jjj]
    return np.asarray(K, np.float32)


def init_layer_params(key, d_model: int):
    """Deterministic stand-ins for the nn.init.normal_(std=0.01) parameters."""
    k1, k2, k3, k4 = jax.random.split(key, 4)
    std = 0.01
    return {
        "wq": std * jax.random.normal(k1, (d_model, d_model), jnp.float32),   # q_net.weight
        "wk": std * jax.random.normal(k2, (d_model, d_model), jnp.float32),   # k_net.weight
        "wv": std * jax.random.normal(k3, (d_model, d_model), jnp.float32),   # Wv
        "wv2": std * jax.random.normal(k4, (d_model, d_model), jnp.float32),  # Wv2
    }


# ---- Pallas kernels ----------------------------------------------------------
def _stack_kernel_ms1(x_ref, w_ref, dt_ref, out_ref, *, L, D):
    """Whole layer stack in one invocation (MULTI_STEP_NUM == 1 fast path).

    The residual stream is a loop-carried value (vreg-resident), written to
    out_ref exactly once at the end.
    """
    x0 = x_ref[...]                  # (R, D) — single input load
    dt = dt_ref[...]                 # (R, D) — deltat pre-broadcast in wrapper

    def layer_body(l, xl):
        # Fused, pre-transposed weight [WDxdu2dx2^T | WDududx^T | A | 0], (D, 4D)
        w_l = w_ref[l]
        proj = jnp.dot(xl, w_l, preferred_element_type=jnp.float32)   # (R, 4D) lane-dense
        hdx = proj[:, 0 * D:1 * D]
        hdud = proj[:, 1 * D:2 * D]
        xA = proj[:, 2 * D:3 * D]                                     # xl @ (scale*Wq^T Wk)
        # value path: head_v @ WDxdu2dx2^T + (head_v @ I) * (head_v @ WDududx^T)
        hv = hdx + xl * hdud
        # soft_max_mask(·, 1) is the identity: masked "attention" degenerates to
        # a per-row rescale of hv by d/(d+1e-6) with d = diag of scaled QK^T.
        d = jnp.sum(xl * xA, axis=1, keepdims=True)                   # (R, 1)
        g = d * pl.reciprocal(d + 1e-6, approx=True)                  # EUP vrcp
        return xl + dt * (g * hv)

    out_ref[...] = lax.fori_loop(0, L, layer_body, x0, unroll=True)


def _stack_kernel_masked(x_ref, w_ref, kmask_ref, dt_ref, out_ref, *, L, B, S, D):
    """General path for MULTI_STEP_NUM > 1 (banded soft_max_mask)."""
    x0 = x_ref[...]                  # (B*S, D)
    dt = dt_ref[...]                 # (B*S, D)
    kmask = kmask_ref[...]           # (S, S)

    def layer_body(l, xl):
        w_l = w_ref[l]               # [Wq^T*scale | Wk^T | WDxdu2dx2^T | WDududx^T]
        proj = jnp.dot(xl, w_l, preferred_element_type=jnp.float32)   # (B*S, 4D)
        hq = proj[:, 0 * D:1 * D].reshape(B, S, D)
        hk = proj[:, 1 * D:2 * D].reshape(B, S, D)
        hv = (proj[:, 2 * D:3 * D] + xl * proj[:, 3 * D:4 * D]).reshape(B, S, D)

        # Batched QK^T with contraction on the last dim of both operands
        # (no in-kernel transpose of hk).
        score = jnp.einsum("bqd,bkd->bqk", hq, hk, preferred_element_type=jnp.float32)
        score = kmask[None, :, :] * score
        denom = jnp.sum(score, axis=2, keepdims=True) + 1e-6          # sum over keys
        prob = score * pl.reciprocal(denom, approx=True)
        attn = jnp.einsum("bqk,bkd->bqd", prob, hv,
                          preferred_element_type=jnp.float32).reshape(B * S, D)
        return xl + dt * attn

    out_ref[...] = lax.fori_loop(0, L, layer_body, x0, unroll=True)


# ---- wrapper -----------------------------------------------------------------
def transformer_encoder(src, deltat, layer_params):
    """src: (S, B, D) f32, deltat: (B,) f32, layer_params: list of per-layer dicts."""
    S, B, D = src.shape
    L = len(layer_params)
    R = B * S
    scale = 1.0 / math.sqrt(D)  # d_head == d_model (nhead == 1)

    # Constant structured masks for the value weights (built once, host side).
    wdx_base = (NX / (2.0 * np.pi)) * generate_dspace(D, 1, 1)   # for WDxdu2dx2
    wdud_base = generate_dspace(D, 1, 0)                         # for WDududx
    # WDu = generate_dspace(D, 0, 0) = identity -> folded into `xl *` in the kernel.

    # Fold batch into the row dimension: (S, B, D) -> (B*S, D).
    x = jnp.transpose(src, (1, 0, 2)).reshape(R, D)
    # Pre-broadcast deltat to a full (R, D) block (row r = b*S + s -> deltat[b]);
    # loaded once in the kernel, so no per-layer broadcast_in_dim.
    dt_full = jnp.broadcast_to(
        jnp.repeat(deltat.astype(jnp.float32), S).reshape(R, 1), (R, D))

    vmem_spec = pl.BlockSpec(memory_space=pltpu.MemorySpace.VMEM)

    if MULTI_STEP_NUM == 1:
        # Per-layer fused weight: [WDxdu2dx2^T | WDududx^T | A | 0-pad], (D, 4D)
        # with A = scale * Wq^T @ Wk so d = rowsum(xl * (xl @ A)) (no hq/hk slices).
        zeros = jnp.zeros((D, D), jnp.float32)
        w_cat = []
        for p in layer_params:
            a_mat = scale * (p["wq"].T @ p["wk"])
            wdx_t = (wdx_base * p["wv2"]).T
            wdud_t = (wdud_base * p["wv"]).T
            w_cat.append(jnp.concatenate([wdx_t, wdud_t, a_mat, zeros], axis=1))
        w_cat = jnp.stack(w_cat, axis=0)                         # (L, D, 4D)

        kernel = functools.partial(_stack_kernel_ms1, L=L, D=D)
        in_specs = [vmem_spec, vmem_spec, vmem_spec]
        args = (x, w_cat, dt_full)
    else:
        # TODO(synk): if S is ever scaled up, synthesize the banded mask in-kernel
        # (broadcasted_iota) and tile the attention over keys instead of keeping a
        # full (B,S,S) f32 score resident (v7x VMEM is 64 MiB).
        kmask = jnp.asarray(soft_max_mask(S, MULTI_STEP_NUM))
        w_cat = []
        for p in layer_params:
            wq_t = (p["wq"] * scale).T
            wk_t = p["wk"].T
            wdx_t = (wdx_base * p["wv2"]).T
            wdud_t = (wdud_base * p["wv"]).T
            w_cat.append(jnp.concatenate([wq_t, wk_t, wdx_t, wdud_t], axis=1))
        w_cat = jnp.stack(w_cat, axis=0)                         # (L, D, 4D)

        kernel = functools.partial(_stack_kernel_masked, L=L, B=B, S=S, D=D)
        in_specs = [vmem_spec, vmem_spec, vmem_spec, vmem_spec]
        args = (x, w_cat, kmask, dt_full)

    out = pl.pallas_call(
        kernel,
        out_shape=jax.ShapeDtypeStruct((R, D), jnp.float32),
        in_specs=in_specs,
        out_specs=vmem_spec,
        input_output_aliases={0: 0},   # residual stream: alias x -> out
    )(*args)

    return jnp.transpose(out.reshape(B, S, D), (1, 0, 2))  # back to (S, B, D)


# ---- pure-JAX reference (mirrors the PyTorch math) ---------------------------
def reference(src, deltat, layer_params):
    S, B, D = src.shape
    wdx_base = (NX / (2.0 * np.pi)) * generate_dspace(D, 1, 1)
    wdud_base = generate_dspace(D, 1, 0)
    kmask = jnp.asarray(soft_max_mask(S, MULTI_STEP_NUM))
    scale = 1.0 / math.sqrt(D)

    out = src
    for p in layer_params:
        wdx = wdx_base * p["wv2"]
        wdud = wdud_base * p["wv"]
        hq = jnp.einsum("sbd,ed->sbe", out, p["wq"])
        hk = jnp.einsum("sbd,ed->sbe", out, p["wk"])
        hv = jnp.einsum("sbd,ed->sbe", out, wdx) + out * jnp.einsum("sbd,ed->sbe", out, wdud)
        score = jnp.einsum("ibd,jbd->ijb", hq, hk) * scale
        score = kmask[:, :, None] * score
        prob = score / (jnp.sum(score, axis=1, keepdims=True) + 1e-6)
        attn = jnp.einsum("ijb,jbd->ibd", prob, hv)
        out = out + deltat[None, :, None] * attn
    return out


if __name__ == "__main__":
    S, B, D = 8, 2, 32   # ntokens=8, batch=2, d_model=32 (nhead=1, d_head=d_model)
    key = jax.random.PRNGKey(0)
    kp, kx, kd = jax.random.split(key, 3)

    # _get_clones deep-copies one encoder_layer, so all layers share identical
    # initial weights: replicate the same parameter dict NUM_LAYERS times.
    base_params = init_layer_params(kp, D)
    layer_params = [base_params for _ in range(NUM_LAYERS)]

    src = jax.random.normal(kx, (S, B, D), jnp.float32)
    deltat = 0.1 * jax.random.uniform(kd, (B,), jnp.float32) + 0.01

    out = transformer_encoder(src, deltat, layer_params)
    out = jax.block_until_ready(out)

    ref = reference(src, deltat, layer_params)
    # atol relaxed slightly vs v1 to cover the EUP approx-reciprocal path.
    np.testing.assert_allclose(np.asarray(out), np.asarray(ref), rtol=5e-4, atol=1e-4)

    print("KERNEL_OK")
</pallas_src>

<mosaic_0001>
module attributes {stable_mosaic.version = 11 : i64} {
  func.func @_stack_kernel_ms1(%arg0: memref<16x32xf32, #tpu.memory_space<vmem>>, %arg1: memref<2x32x128xf32, #tpu.memory_space<vmem>>, %arg2: memref<16x32xf32, #tpu.memory_space<vmem>>, %arg3: memref<16x32xf32, #tpu.memory_space<vmem>>) attributes {dimension_semantics = [], scalar_prefetch = 0 : i64, scratch_operands = 0 : i64, tpu.core_type = #tpu.core_type<tc>} {
    %c0 = arith.constant 0 : index
    %c0_0 = arith.constant 0 : index
    %0 = vector.load %arg0[%c0, %c0_0] : memref<16x32xf32, #tpu.memory_space<vmem>>, vector<16x32xf32>
    %c0_1 = arith.constant 0 : index
    %c0_2 = arith.constant 0 : index
    %1 = vector.load %arg2[%c0_1, %c0_2] : memref<16x32xf32, #tpu.memory_space<vmem>>, vector<16x32xf32>
    %c0_i32 = arith.constant 0 : i32
    %2 = arith.index_cast %c0_i32 : i32 to index
    %c0_3 = arith.constant 0 : index
    %c0_4 = arith.constant 0 : index
    %3 = vector.load %arg1[%2, %c0_3, %c0_4] : memref<2x32x128xf32, #tpu.memory_space<vmem>>, vector<1x32x128xf32>
    %4 = vector.shape_cast %3 : vector<1x32x128xf32> to vector<32x128xf32>
    %cst = arith.constant dense<0.000000e+00> : vector<16x128xf32>
    %5 = tpu.matmul %0, %4, %cst {dimension_numbers = #tpu.dot_dimension_numbers<[1], [0], [0], [1], [0, 0, 1, 1], [], []>} : vector<16x32xf32>, vector<32x128xf32>, vector<16x128xf32> -> vector<16x128xf32>
    %6 = vector.extract_strided_slice %5 {offsets = [0, 0], sizes = [16, 32], strides = [1, 1]} : vector<16x128xf32> to vector<16x32xf32>
    %7 = vector.extract_strided_slice %5 {offsets = [0, 32], sizes = [16, 32], strides = [1, 1]} : vector<16x128xf32> to vector<16x32xf32>
    %8 = vector.extract_strided_slice %5 {offsets = [0, 64], sizes = [16, 32], strides = [1, 1]} : vector<16x128xf32> to vector<16x32xf32>
    %9 = arith.mulf %0, %7 : vector<16x32xf32>
    %10 = arith.addf %6, %9 : vector<16x32xf32>
    %11 = arith.mulf %0, %8 : vector<16x32xf32>
    %cst_5 = arith.constant dense<0.000000e+00> : vector<16xf32>
    %12 = vector.multi_reduction <add>, %11, %cst_5 [1] : vector<16x32xf32> to vector<16xf32>
    %13 = vector.shape_cast %12 : vector<16xf32> to vector<16x1xf32>
    %cst_6 = arith.constant 9.99999997E-7 : f32
    %14 = vector.broadcast %cst_6 : f32 to vector<16x1xf32>
    %15 = arith.addf %13, %14 : vector<16x1xf32>
    %16 = tpu.reciprocal %15 {approx = true} : vector<16x1xf32> -> vector<16x1xf32>
    %17 = arith.mulf %13, %16 : vector<16x1xf32>
    %18 = vector.broadcast %17 : vector<16x1xf32> to vector<16x32xf32>
    %19 = arith.mulf %18, %10 : vector<16x32xf32>
    %20 = arith.mulf %1, %19 : vector<16x32xf32>
    %21 = arith.addf %0, %20 : vector<16x32xf32>
    %c1_i32 = arith.constant 1 : i32
    %22 = arith.index_cast %c1_i32 : i32 to index
    %c0_7 = arith.constant 0 : index
    %c0_8 = arith.constant 0 : index
    %23 = vector.load %arg1[%22, %c0_7, %c0_8] : memref<2x32x128xf32, #tpu.memory_space<vmem>>, vector<1x32x128xf32>
    %24 = vector.shape_cast %23 : vector<1x32x128xf32> to vector<32x128xf32>
    %cst_9 = arith.constant dense<0.000000e+00> : vector<16x128xf32>
    %25 = tpu.matmul %21, %24, %cst_9 {dimension_numbers = #tpu.dot_dimension_numbers<[1], [0], [0], [1], [0, 0, 1, 1], [], []>} : vector<16x32xf32>, vector<32x128xf32>, vector<16x128xf32> -> vector<16x128xf32>
    %26 = vector.extract_strided_slice %25 {offsets = [0, 0], sizes = [16, 32], strides = [1, 1]} : vector<16x128xf32> to vector<16x32xf32>
    %27 = vector.extract_strided_slice %25 {offsets = [0, 32], sizes = [16, 32], strides = [1, 1]} : vector<16x128xf32> to vector<16x32xf32>
    %28 = vector.extract_strided_slice %25 {offsets = [0, 64], sizes = [16, 32], strides = [1, 1]} : vector<16x128xf32> to vector<16x32xf32>
    %29 = arith.mulf %21, %27 : vector<16x32xf32>
    %30 = arith.addf %26, %29 : vector<16x32xf32>
    %31 = arith.mulf %21, %28 : vector<16x32xf32>
    %cst_10 = arith.constant dense<0.000000e+00> : vector<16xf32>
    %32 = vector.multi_reduction <add>, %31, %cst_10 [1] : vector<16x32xf32> to vector<16xf32>
    %33 = vector.shape_cast %32 : vector<16xf32> to vector<16x1xf32>
    %cst_11 = arith.constant 9.99999997E-7 : f32
    %34 = vector.broadcast %cst_11 : f32 to vector<16x1xf32>
    %35 = arith.addf %33, %34 : vector<16x1xf32>
    %36 = tpu.reciprocal %35 {approx = true} : vector<16x1xf32> -> vector<16x1xf32>
    %37 = arith.mulf %33, %36 : vector<16x1xf32>
    %38 = vector.broadcast %37 : vector<16x1xf32> to vector<16x32xf32>
    %39 = arith.mulf %38, %30 : vector<16x32xf32>
    %40 = arith.mulf %1, %39 : vector<16x32xf32>
    %41 = arith.addf %21, %40 : vector<16x32xf32>
    %c2_i32 = arith.constant 2 : i32
    %c0_12 = arith.constant 0 : index
    %c0_13 = arith.constant 0 : index
    %42 = vector.load %arg3[%c0_12, %c0_13] : memref<16x32xf32, #tpu.memory_space<vmem>>, vector<16x32xf32>
    tpu.vector_store %arg3[%c0_12, %c0_13], %41 {strides = array<i32>} : memref<16x32xf32, #tpu.memory_space<vmem>>, vector<16x32xf32>,
    return
  }
}

</mosaic_0001>

<llo_original>
// kernel: tpu_custom_call.1
$region0: #{tpu_custom_call.1}
  #allocation0 [shape = 'u32[]', space=smem, size = 0x4, offset = 0x4, fixed_abs, tag = 'smem constant byte address 0x4 - core index']
  #allocation1 [shape = 'u32[144,128]{1,0:T(1,128)}', space=vmem, size = 0x12000, scoped, tag = 'internal scratch']
  %s0 = inlined_call_operand.hbm [shape: f32[16,32], index: 0, kind: input, shape index: {}, may-alias: {0,3}]
  %s1 = inlined_call_operand.hbm [shape: f32[2,32,128], index: 1, kind: input, shape index: {}]
  %s2 = inlined_call_operand.vmem [shape: f32[16,32], index: 2, kind: input, shape index: {}]
  %s3 = inlined_call_operand.hbm [shape: f32[16,32], index: 3, kind: output, shape index: {}, may-alias: {0,3}]
  %s4 = sld [smem:[#allocation0]]
  $region30: #{tpu_custom_call.1} parent=0
    _
  %s6 = ssub.s32 1, %s4
  %s7 = scalar_select 0, %s6, %s4
  $region1: #{tpu_custom_call.1} parent=0
    #allocation2 [shape = 'u8[8192]{0}', space=vmem, size = 0x2000, scoped, tag = 'input window, operand 0, single buffered']
    #allocation3 [shape = 's32[1]{0}', space=sflag, size = 0x4, scoped, tag = 'scoped memory for tpu_custom_call.1']
    #allocation4 [shape = 's32[1]{0}', space=sflag, size = 0x4, scoped, tag = 'scoped memory for tpu_custom_call.1']
    #allocation5 [shape = 'u8[32768]{0}', space=vmem, size = 0x8000, scoped, tag = 'input window, operand 1, single buffered']
    #allocation6 [shape = 's32[1]{0}', space=sflag, size = 0x4, scoped, tag = 'scoped memory for tpu_custom_call.1']
    #allocation7 [shape = 'u8[8192]{0}', space=vmem, size = 0x2000, scoped, tag = 'output window, operand 0, single buffered']
    %8 = vsyncpa [#allocation3], 0
    %9 = vsyncpa [#allocation6], 0
    %10 = vsyncpa [#allocation4], 0
    // Predicated region
    $region2: #{tpu_custom_call.1} parent=1 // pred_check
      _
    $region3: #{tpu_custom_call.1} parent=1 // pred_check_branch
      %12 = sbr.rel (0) target = $region5
    $region4: #{tpu_custom_call.1} parent=1 // pred_region
      %s14 = ssub.s32 256, 256
      %15 = vsyncadd [#allocation3], %s14
      %s16 = sshll.u32 [#allocation2], 4
      %s17 = int_to_ptr.vmem [resolvable:$true] %s16
      %22 = dma.hbm_to_vmem [thread:$0]  %s0, 256, %s17, [#allocation3], 128, 128, 8
    $region5: #{tpu_custom_call.1} parent=1 // pred_fallthru
      _
    // Predicated region
    $region6: #{tpu_custom_call.1} parent=1 // pred_check
      _
    $region7: #{tpu_custom_call.1} parent=1 // pred_check_branch
      %24 = sbr.rel (0) target = $region9
    $region8: #{tpu_custom_call.1} parent=1 // pred_region
      %s26 = ssub.s32 1024, 1024
      %27 = vsyncadd [#allocation6], %s26
      %s28 = sshll.u32 [#allocation5], 4
      %s29 = int_to_ptr.vmem [resolvable:$true] %s28
      %34 = dma.hbm_to_vmem [thread:$0]  %s1, 1024, %s29, [#allocation6], 128, 128, 8
    $region9: #{tpu_custom_call.1} parent=1 // pred_fallthru
      _
    // Predicated region
    $region10: #{tpu_custom_call.1} parent=1 // pred_check
      _
    $region11: #{tpu_custom_call.1} parent=1 // pred_check_branch
      %36 = sbr.rel (0) target = $region13
    $region12: #{tpu_custom_call.1} parent=1 // pred_region
      _
    $region13: #{tpu_custom_call.1} parent=1 // pred_fallthru
      _
    // Predicated region
    $region14: #{tpu_custom_call.1} parent=1 // pred_check
      _
    $region15: #{tpu_custom_call.1} parent=1 // pred_check_branch
      %38 = sbr.rel (0) target = $region17
    $region16: #{tpu_custom_call.1} parent=1 // pred_region
      %39 = dma.done [#allocation3], 256
    $region17: #{tpu_custom_call.1} parent=1 // pred_fallthru
      _
    // Predicated region
    $region18: #{tpu_custom_call.1} parent=1 // pred_check
      _
    $region19: #{tpu_custom_call.1} parent=1 // pred_check_branch
      %41 = sbr.rel (0) target = $region21
    $region20: #{tpu_custom_call.1} parent=1 // pred_region
      %42 = dma.done [#allocation6], 1024
    $region21: #{tpu_custom_call.1} parent=1 // pred_fallthru
      _
    %v43 = vld [vmem:[#allocation2] sm:$0xff]
    %v44 = vld [vmem:[#allocation2 + $0x8] sm:$0xff]
    %v45 = vld [vmem:[%s2] sm:$0xff]
    %v46 = vld [vmem:[%s2 + $0x8] sm:$0xff]
    %v47 = vld [vmem:[#allocation5] sm:$0xff]
    %v48 = vld [vmem:[#allocation5 + $0x8] sm:$0xff]
    %v49 = vld [vmem:[#allocation5 + $0x10] sm:$0xff]
    %v50 = vld [vmem:[#allocation5 + $0x18] sm:$0xff]
    %vm51 = vcmask 261120
    %v53 = vsel %vm51, %v43, 0
    %v56 = vsel %vm51, %v44, 0
    %58 = vmatprep.subr.mxu0 0.0
    %59 = vmatpush1.msra.mxu0 0.0
    %60 = vmatprep.subr.mxu0 0.0
    %61 = vmatpush1.msra.mxu0 0.0
    %62 = vmatprep.subr.mxu0 0.0
    %63 = vmatpush1.msra.mxu0 0.0
    %64 = vmatprep.subr.mxu0 0.0
    %65 = vmatpush1.msra.mxu0 0.0
    %66 = vmatprep.subr.mxu0 0.0
    %67 = vmatpush1.msra.mxu0 0.0
    %68 = vmatprep.subr.mxu0 0.0
    %69 = vmatpush1.msra.mxu0 0.0
    %70 = vmatprep.subr.mxu0 0.0
    %71 = vmatpush1.msra.mxu0 0.0
    %72 = vmatprep.subr.mxu0 0.0
    %73 = vmatpush1.msra.mxu0 0.0
    %74 = vmatprep.subr.mxu0 0.0
    %75 = vmatpush1.msra.mxu0 0.0
    %76 = vmatprep.subr.mxu0 0.0
    %77 = vmatpush1.msra.mxu0 0.0
    %78 = vmatprep.subr.mxu0 0.0
    %79 = vmatpush1.msra.mxu0 0.0
    %80 = vmatprep.subr.mxu0 0.0
    %81 = vmatpush1.msra.mxu0 0.0
    %82 = vmatprep.subr.mxu0 0.0
    %83 = vmatpush1.msra.mxu0 %v50
    %84 = vmatprep.subr.mxu0 0.0
    %85 = vmatpush1.msra.mxu0 %v49
    %86 = vmatprep.subr.mxu0 0.0
    %87 = vmatpush1.msra.mxu0 %v48
    %88 = vmatprep.subr.mxu0 0.0
    %89 = vmatpush1.msra.mxu0 %v47
    %90 = vmatprep.subr.mxu0 0.0
    %91 = vmatpush2.msra.mxu0 0.0
    %92 = vmatprep.subr.mxu0 0.0
    %93 = vmatpush2.msra.mxu0 0.0
    %94 = vmatprep.subr.mxu0 0.0
    %95 = vmatpush2.msra.mxu0 0.0
    %96 = vmatprep.subr.mxu0 0.0
    %97 = vmatpush2.msra.mxu0 0.0
    %98 = vmatprep.subr.mxu0 0.0
    %99 = vmatpush2.msra.mxu0 0.0
    %100 = vmatprep.subr.mxu0 0.0
    %101 = vmatpush2.msra.mxu0 0.0
    %102 = vmatprep.subr.mxu0 0.0
    %103 = vmatpush2.msra.mxu0 0.0
    %104 = vmatprep.subr.mxu0 0.0
    %105 = vmatpush2.msra.mxu0 0.0
    %106 = vmatprep.subr.mxu0 0.0
    %107 = vmatpush2.msra.mxu0 0.0
    %108 = vmatprep.subr.mxu0 0.0
    %109 = vmatpush2.msra.mxu0 0.0
    %110 = vmatprep.subr.mxu0 0.0
    %111 = vmatpush2.msra.mxu0 0.0
    %112 = vmatprep.subr.mxu0 0.0
    %113 = vmatpush2.msra.mxu0 0.0
    %114 = vmatprep.subr.mxu0 0.0
    %115 = vmatpush2.msra.mxu0 0.0
    %116 = vmatprep.subr.mxu0 0.0
    %117 = vmatpush2.msra.mxu0 0.0
    %118 = vmatprep.subr.mxu0 0.0
    %119 = vmatpush2.msra.mxu0 0.0
    %120 = vmatprep.subr.mxu0 0.0
    %121 = vmatpush2.msra.mxu0 0.0
    %122 = vmatprep.mubr.f32.mxu0 0.0
    %123 = vmatmul.mubr.f32.gmra.mxu0 %v53
    %v124 = vpop.f32.mrf.mxu0
    %v125 = vadd.f32 0.0, %v124
    %v126 = vpop.f32.mrf.mxu0
    %127 = vmatprep.mubr.f32.mxu0 0.0
    %128 = vmatmul.mubr.f32.gmra.mxu0 %v56
    %v129 = vpop.f32.mrf.mxu0
    %v130 = vadd.f32 0.0, %v129
    %v131 = vpop.f32.mrf.mxu0
    %132 = vdwg.mxu0
    %135 = vrot.lane.b32.xlu0 %v125, 96
    %v136 = vpop.permute.xlu0 %135
    %137 = vrot.lane.b32.xlu0 %v130, 96
    %v138 = vpop.permute.xlu0 %137
    %v141 = vmul.f32 %v43, %v136
    %v142 = vmul.f32 %v44, %v138
    %v143 = vadd.f32 %v125, %v141
    %v144 = vadd.f32 %v130, %v142
    %145 = vrot.lane.b32.xlu0 %v125, 64
    %v146 = vpop.permute.xlu0 %145
    %147 = vrot.lane.b32.xlu0 %v130, 64
    %v148 = vpop.permute.xlu0 %147
    %v151 = vmul.f32 %v43, %v146
    %v152 = vmul.f32 %v44, %v148
    %v153 = vsel %vm51, %v151, 0.0
    %154 = vadd.xlane.f32.xlu0 %v153
    %v155 = vpop.xlane.xlu0 %154
    %v156 = vsel %vm51, %v152, 0.0
    %157 = vadd.xlane.f32.xlu0 %v156
    %v158 = vpop.xlane.xlu0 %157
    %v159 = vadd.f32 %v155, 1e-06
    %v160 = vadd.f32 %v158, 1e-06
    %v161 = vrcp.pop %v159
    %v162 = vrcp.pop %v160
    %v163 = vmul.f32 %v155, %v161
    %v164 = vmul.f32 %v158, %v162
    %v165 = vmul.f32 %v163, %v143
    %v166 = vmul.f32 %v164, %v144
    %v167 = vmul.f32 %v45, %v165
    %v168 = vmul.f32 %v46, %v166
    %v169 = vadd.f32 %v43, %v167
    %v170 = vadd.f32 %v44, %v168
    %s171 = scalar_lea.vmem [#allocation5], 32
    %v172 = vld [vmem:[%s171] sm:$0xff]
    %v173 = vld [vmem:[%s171 + $0x8] sm:$0xff]
    %v174 = vld [vmem:[%s171 + $0x10] sm:$0xff]
    %v175 = vld [vmem:[%s171 + $0x18] sm:$0xff]
    %v177 = vsel %vm51, %v169, 0
    %v180 = vsel %vm51, %v170, 0
    %182 = vmatprep.subr.mxu0 0.0
    %183 = vmatpush1.msra.mxu0 0.0
    %184 = vmatprep.subr.mxu0 0.0
    %185 = vmatpush1.msra.mxu0 0.0
    %186 = vmatprep.subr.mxu0 0.0
    %187 = vmatpush1.msra.mxu0 0.0
    %188 = vmatprep.subr.mxu0 0.0
    %189 = vmatpush1.msra.mxu0 0.0
    %190 = vmatprep.subr.mxu0 0.0
    %191 = vmatpush1.msra.mxu0 0.0
    %192 = vmatprep.subr.mxu0 0.0
    %193 = vmatpush1.msra.mxu0 0.0
    %194 = vmatprep.subr.mxu0 0.0
    %195 = vmatpush1.msra.mxu0 0.0
    %196 = vmatprep.subr.mxu0 0.0
    %197 = vmatpush1.msra.mxu0 0.0
    %198 = vmatprep.subr.mxu0 0.0
    %199 = vmatpush1.msra.mxu0 0.0
    %200 = vmatprep.subr.mxu0 0.0
    %201 = vmatpush1.msra.mxu0 0.0
    %202 = vmatprep.subr.mxu0 0.0
    %203 = vmatpush1.msra.mxu0 0.0
    %204 = vmatprep.subr.mxu0 0.0
    %205 = vmatpush1.msra.mxu0 0.0
    %206 = vmatprep.subr.mxu0 0.0
    %207 = vmatpush1.msra.mxu0 %v175
    %208 = vmatprep.subr.mxu0 0.0
    %209 = vmatpush1.msra.mxu0 %v174
    %210 = vmatprep.subr.mxu0 0.0
    %211 = vmatpush1.msra.mxu0 %v173
    %212 = vmatprep.subr.mxu0 0.0
    %213 = vmatpush1.msra.mxu0 %v172
    %214 = vmatprep.subr.mxu0 0.0
    %215 = vmatpush2.msra.mxu0 0.0
    %216 = vmatprep.subr.mxu0 0.0
    %217 = vmatpush2.msra.mxu0 0.0
    %218 = vmatprep.subr.mxu0 0.0
    %219 = vmatpush2.msra.mxu0 0.0
    %220 = vmatprep.subr.mxu0 0.0
    %221 = vmatpush2.msra.mxu0 0.0
    %222 = vmatprep.subr.mxu0 0.0
    %223 = vmatpush2.msra.mxu0 0.0
    %224 = vmatprep.subr.mxu0 0.0
    %225 = vmatpush2.msra.mxu0 0.0
    %226 = vmatprep.subr.mxu0 0.0
    %227 = vmatpush2.msra.mxu0 0.0
    %228 = vmatprep.subr.mxu0 0.0
    %229 = vmatpush2.msra.mxu0 0.0
    %230 = vmatprep.subr.mxu0 0.0
    %231 = vmatpush2.msra.mxu0 0.0
    %232 = vmatprep.subr.mxu0 0.0
    %233 = vmatpush2.msra.mxu0 0.0
    %234 = vmatprep.subr.mxu0 0.0
    %235 = vmatpush2.msra.mxu0 0.0
    %236 = vmatprep.subr.mxu0 0.0
    %237 = vmatpush2.msra.mxu0 0.0
    %238 = vmatprep.subr.mxu0 0.0
    %239 = vmatpush2.msra.mxu0 0.0
    %240 = vmatprep.subr.mxu0 0.0
    %241 = vmatpush2.msra.mxu0 0.0
    %242 = vmatprep.subr.mxu0 0.0
    %243 = vmatpush2.msra.mxu0 0.0
    %244 = vmatprep.subr.mxu0 0.0
    %245 = vmatpush2.msra.mxu0 0.0
    %246 = vmatprep.mubr.f32.mxu0 0.0
    %247 = vmatmul.mubr.f32.gmra.mxu0 %v177
    %v248 = vpop.f32.mrf.mxu0
    %v249 = vadd.f32 0.0, %v248
    %v250 = vpop.f32.mrf.mxu0
    %251 = vmatprep.mubr.f32.mxu0 0.0
    %252 = vmatmul.mubr.f32.gmra.mxu0 %v180
    %v253 = vpop.f32.mrf.mxu0
    %v254 = vadd.f32 0.0, %v253
    %v255 = vpop.f32.mrf.mxu0
    %256 = vdwg.mxu0
    %259 = vrot.lane.b32.xlu0 %v249, 96
    %v260 = vpop.permute.xlu0 %259
    %261 = vrot.lane.b32.xlu0 %v254, 96
    %v262 = vpop.permute.xlu0 %261
    %v265 = vmul.f32 %v169, %v260
    %v266 = vmul.f32 %v170, %v262
    %v267 = vadd.f32 %v249, %v265
    %v268 = vadd.f32 %v254, %v266
    %269 = vrot.lane.b32.xlu0 %v249, 64
    %v270 = vpop.permute.xlu0 %269
    %271 = vrot.lane.b32.xlu0 %v254, 64
    %v272 = vpop.permute.xlu0 %271
    %v275 = vmul.f32 %v169, %v270
    %v276 = vmul.f32 %v170, %v272
    %v277 = vsel %vm51, %v275, 0.0
    %278 = vadd.xlane.f32.xlu0 %v277
    %v279 = vpop.xlane.xlu0 %278
    %v280 = vsel %vm51, %v276, 0.0
    %281 = vadd.xlane.f32.xlu0 %v280
    %v282 = vpop.xlane.xlu0 %281
    %v283 = vadd.f32 %v279, 1e-06
    %v284 = vadd.f32 %v282, 1e-06
    %v285 = vrcp.pop %v283
    %v286 = vrcp.pop %v284
    %v287 = vmul.f32 %v279, %v285
    %v288 = vmul.f32 %v282, %v286
    %v289 = vmul.f32 %v287, %v267
    %v290 = vmul.f32 %v288, %v268
    %v291 = vmul.f32 %v45, %v289
    %v292 = vmul.f32 %v46, %v290
    %v293 = vadd.f32 %v169, %v291
    %v294 = vadd.f32 %v170, %v292
    %295 = vst.msk [vmem:[#allocation7] sm:$0xff] %vm51, %v293
    %296 = vst.msk [vmem:[#allocation7 + $0x8] sm:$0xff] %vm51, %v294
    // Predicated region
    $region22: #{tpu_custom_call.1} parent=1 // pred_check
      _
    $region23: #{tpu_custom_call.1} parent=1 // pred_check_branch
      %298 = sbr.rel (0) target = $region25
    $region24: #{tpu_custom_call.1} parent=1 // pred_region
      %s300 = ssub.s32 256, 256
      %301 = vsyncadd [#allocation4], %s300
      %s302 = sshll.u32 [#allocation7], 4
      %s303 = int_to_ptr.vmem [resolvable:$true] %s302
      %308 = dma.vmem_to_hbm [thread:$0]  %s303, 256, %s3, [#allocation4], 128, 128, 8
    $region25: #{tpu_custom_call.1} parent=1 // pred_fallthru
      _
    // Predicated region
    $region26: #{tpu_custom_call.1} parent=1 // pred_check
      _
    $region27: #{tpu_custom_call.1} parent=1 // pred_check_branch
      %310 = sbr.rel (0) target = $region29
    $region28: #{tpu_custom_call.1} parent=1 // pred_region
      %311 = dma.done [#allocation4], 256
    $region29: #{tpu_custom_call.1} parent=1 // pred_fallthru
      _
    %312 = vsyncpa [#allocation3], 1
    %313 = vsyncpa [#allocation6], 1
    %314 = vsyncpa [#allocation4], 1

</llo_original>
